<compile_context>
chip_gen: v6e
topology: v6e:2x2x1
jax: 0.10.0
libtpu: 0.0.40
codegen_flags: <defaults>
</compile_context>

<pallas_src>
import functools

import jax
import jax.numpy as jnp
from jax import lax
from jax.experimental import pallas as pl
from jax.experimental.pallas import tpu as pltpu


def _round_up(x, m):
    return ((x + m - 1) // m) * m


def _cdiv(a, b):
    return (a + b - 1) // b


def _pad2(a, r, c):
    pr, pc = r - a.shape[0], c - a.shape[1]
    if pr == 0 and pc == 0:
        return a
    return jnp.pad(a, ((0, pr), (0, pc)))


def _vmem_capacity_bytes():
    try:
        return int(pltpu.get_tpu_info().vmem_capacity_bytes)
    except Exception:  # non-TPU backend / interpret mode fallback
        return 128 * 1024 * 1024


def _lm_head_kernel(x_ref, wd_ref, bd_ref, g_ref, be_ref, wv_ref, bv_ref,
                    o_ref, h_scratch, *, eps, hidden, hidden_pad, approx_gelu):
    # x_ref:  (TM, Hp)      wd_ref: (Hp, Hp)  torch [out, in] layout
    # bd/g/be: (1, Hp)      wv_ref: (TV, Hp)  torch [out, in] layout
    # bv_ref: (1, TV)       o_ref:  (TM, TV)  h_scratch: (TM, Hp) matmul dtype
    j = pl.program_id(1)

    @pl.when(j == 0)
    def _transform():
        # Dense: X @ Wd^T (contract last dims; MXU, native-dtype operands, f32 acc)
        y = lax.dot_general(
            x_ref[...], wd_ref[...],
            dimension_numbers=(((1,), (1,)), ((), ())),
            preferred_element_type=jnp.float32,
        )
        y = y + bd_ref[...].astype(jnp.float32)

        # GELU (exact erf form matches torch.nn.functional.gelu default)
        if approx_gelu:
            c = jnp.float32(0.7978845608028654)  # sqrt(2/pi)
            y = 0.5 * y * (1.0 + jnp.tanh(c * (y + 0.044715 * y * y * y)))
        else:
            y = 0.5 * y * (1.0 + lax.erf(y * jnp.float32(0.7071067811865476)))

        # LayerNorm over the *real* hidden columns (mask out lane padding)
        if hidden_pad != hidden:
            mask = lax.broadcasted_iota(jnp.int32, (1, hidden_pad), 1) < hidden
            y = jnp.where(mask, y, 0.0)
        inv_h = jnp.float32(1.0 / hidden)
        mean = jnp.sum(y, axis=-1, keepdims=True) * inv_h
        cen = y - mean
        if hidden_pad != hidden:
            cen = jnp.where(mask, cen, 0.0)
        var = jnp.sum(cen * cen, axis=-1, keepdims=True) * inv_h
        normed = cen * lax.rsqrt(var + jnp.float32(eps))
        h = normed * g_ref[...].astype(jnp.float32) + be_ref[...].astype(jnp.float32)
        # gamma/beta padding is zero, so padded hidden lanes of h are exactly 0.
        h_scratch[...] = h.astype(h_scratch.dtype)

    # Decoder: H @ Wv^T + bias for this vocab tile (native-dtype operands, f32 acc)
    logits = lax.dot_general(
        h_scratch[...], wv_ref[...],
        dimension_numbers=(((1,), (1,)), ((), ())),
        preferred_element_type=jnp.float32,
    ) + bv_ref[...].astype(jnp.float32)
    o_ref[...] = logits.astype(o_ref.dtype)


def coin_lm_prediction_head(x, w_dense, b_dense, gamma, beta, w_dec, b_dec, *,
                            eps=1e-12, tile_rows=None, tile_vocab=None,
                            approx_gelu=False, matmul_dtype=None, wv_buffers=2):
    """x: [rows, H]. w_dense: [H, H], w_dec: [V, H] (PyTorch Linear layout).

    matmul_dtype: optional dtype (e.g. jnp.bfloat16) for MXU operands; halves HBM
    traffic / VMEM for f32 callers at a small precision cost. None = input dtype.
    """
    rows, hidden = x.shape
    vocab = w_dec.shape[0]
    out_dt = x.dtype
    mm_dt = jnp.dtype(matmul_dtype) if matmul_dtype is not None else jnp.dtype(out_dt)
    dsize = mm_dt.itemsize
    osize = jnp.dtype(out_dt).itemsize

    # Lane-aligned hidden (128; multiples of 256 are free for common BERT sizes).
    hp = _round_up(hidden, 128)

    # --- generation-aware VMEM budget and default tiles -------------------------
    vmem_cap = _vmem_capacity_bytes()
    vmem_limit = int(vmem_cap * 0.85)          # headroom for compiler scratch
    small_vmem = vmem_cap < (96 * 1024 * 1024)  # v7x: 64 MiB per TensorCore

    if tile_rows is None:
        tile_rows = 512 if small_vmem else 1024
    if tile_vocab is None:
        tile_vocab = 2048

    # Balanced row tiles (avoid up to tm-1 dead padded rows on the last tile).
    n_row_tiles = max(1, _cdiv(rows, tile_rows))
    if small_vmem and n_row_tiles == 1 and rows >= 512:
        n_row_tiles = 2  # megacore: give each TensorCore a row tile
    tm = min(_round_up(_cdiv(rows, n_row_tiles), 8), _round_up(rows, 8))

    tv = _round_up(min(tile_vocab, _round_up(vocab, 128)), 128)

    # --- shrink tiles if the estimated VMEM footprint would not fit -------------
    def _footprint(tm_, tv_):
        fixed = hp * hp * dsize + 3 * hp * 4 + 2 * tv_ * 4   # dense W (1-buf) + vecs
        per = (2 * tm_ * hp * dsize                           # x tile (2-buf)
               + wv_buffers * tv_ * hp * dsize                # decoder W tiles
               + 2 * tm_ * tv_ * osize                        # output tile (2-buf)
               + tm_ * hp * dsize)                            # resident h scratch
        return fixed + per

    while _footprint(tm, tv) > vmem_limit and tv > 256:
        tv //= 2
    while _footprint(tm, tv) > vmem_limit and tm > 64:
        tm = max(64, _round_up(tm // 2, 8))

    rows_p = _round_up(rows, tm)
    vp = _round_up(vocab, tv)

    # --- pad operands; matmul operands in mm_dt, elementwise params stay f32-ish -
    xp = _pad2(x, rows_p, hp).astype(mm_dt)
    wdp = _pad2(w_dense, hp, hp).astype(mm_dt)
    wvp = _pad2(w_dec, vp, hp).astype(mm_dt)
    bdp = _pad2(b_dense.reshape(1, -1), 1, hp)
    gp = _pad2(gamma.reshape(1, -1), 1, hp)
    bep = _pad2(beta.reshape(1, -1), 1, hp)
    bvp = _pad2(b_dec.reshape(1, -1), 1, vp)

    kernel = functools.partial(_lm_head_kernel, eps=eps, hidden=hidden,
                               hidden_pad=hp, approx_gelu=approx_gelu)

    const_buf = pl.Buffered(1)   # grid-invariant blocks: no double-buffering

    out = pl.pallas_call(
        kernel,
        out_shape=jax.ShapeDtypeStruct((rows_p, vp), out_dt),
        grid_spec=pltpu.PrefetchScalarGridSpec(
            num_scalar_prefetch=0,
            grid=(rows_p // tm, vp // tv),
            in_specs=[
                # x row tile: resident across the vocab axis
                pl.BlockSpec((tm, hp), lambda i, j: (i, 0)),
                # dense W / bias / gamma / beta: identical block every step
                pl.BlockSpec((hp, hp), lambda i, j: (0, 0), pipeline_mode=const_buf),
                pl.BlockSpec((1, hp), lambda i, j: (0, 0), pipeline_mode=const_buf),
                pl.BlockSpec((1, hp), lambda i, j: (0, 0), pipeline_mode=const_buf),
                pl.BlockSpec((1, hp), lambda i, j: (0, 0), pipeline_mode=const_buf),
                # decoder W vocab tile (streamed; wv_buffers-deep pipeline)
                pl.BlockSpec((tv, hp), lambda i, j: (j, 0),
                             pipeline_mode=pl.Buffered(wv_buffers)),
                # decoder bias vocab tile
                pl.BlockSpec((1, tv), lambda i, j: (0, j)),
            ],
            out_specs=pl.BlockSpec((tm, tv), lambda i, j: (i, j)),
            scratch_shapes=[pltpu.VMEM((tm, hp), mm_dt)],  # transformed hidden tile
        ),
        compiler_params=pltpu.CompilerParams(
            # Row axis may split across TensorCores; vocab axis MUST stay
            # "arbitrary" (h_scratch is written only at j == 0 on one core).
            dimension_semantics=("parallel", "arbitrary"),
            vmem_limit_bytes=vmem_limit,
        ),
    )(xp, wdp, bdp, gp, bep, wvp, bvp)

    return out[:rows, :vocab]


def _reference(x, w_dense, b_dense, gamma, beta, w_dec, b_dec, eps=1e-12):
    y = x @ w_dense.T + b_dense
    y = 0.5 * y * (1.0 + lax.erf(y * 0.7071067811865476))
    mean = jnp.mean(y, axis=-1, keepdims=True)
    var = jnp.mean((y - mean) ** 2, axis=-1, keepdims=True)
    h = (y - mean) / jnp.sqrt(var + eps) * gamma + beta
    return h @ w_dec.T + b_dec


if __name__ == "__main__":
    # Small shapes: batch=2, seq=8, hidden=32, vocab=48  ->  rows = 16
    batch, seq, hidden, vocab = 2, 8, 32, 48
    eps = 1e-12

    key = jax.random.PRNGKey(0)
    kx, kw, kb, kg, kbe, kv, kvb = jax.random.split(key, 7)

    x = jax.random.normal(kx, (batch, seq, hidden), dtype=jnp.float32)
    # Deterministic synthetic parameters (shapes per nn.Linear / nn.LayerNorm)
    w_dense = jax.random.normal(kw, (hidden, hidden), dtype=jnp.float32) * 0.02
    b_dense = jax.random.normal(kb, (hidden,), dtype=jnp.float32) * 0.02
    gamma = 1.0 + 0.1 * jax.random.normal(kg, (hidden,), dtype=jnp.float32)
    beta = 0.1 * jax.random.normal(kbe, (hidden,), dtype=jnp.float32)
    w_dec = jax.random.normal(kv, (vocab, hidden), dtype=jnp.float32) * 0.02
    # Module initializes the tied decoder bias to zeros; use small random values
    # here so the bias-add path is actually exercised numerically.
    b_dec = 0.02 * jax.random.normal(kvb, (vocab,), dtype=jnp.float32)

    x2d = x.reshape(batch * seq, hidden)

    out = coin_lm_prediction_head(x2d, w_dense, b_dense, gamma, beta,
                                  w_dec, b_dec, eps=eps)
    out = jax.block_until_ready(out)

    ref = _reference(x2d, w_dense, b_dense, gamma, beta, w_dec, b_dec, eps=eps)
    assert out.shape == (batch * seq, vocab)
    assert jnp.allclose(out, ref, atol=1e-5, rtol=1e-5), "mismatch vs reference"

    # back to [batch, seq, vocab] like the PyTorch module output
    out = out.reshape(batch, seq, vocab)
    jax.block_until_ready(out)
    print("KERNEL_OK")
</pallas_src>

<mosaic_0001>
module attributes {stable_mosaic.version = 11 : i64} {
  func.func @_lm_head_kernel(%arg0: i32, %arg1: i32, %arg2: memref<16x128xf32, #tpu.memory_space<vmem>>, %arg3: memref<128x128xf32, #tpu.memory_space<vmem>>, %arg4: memref<1x128xf32, #tpu.memory_space<vmem>>, %arg5: memref<1x128xf32, #tpu.memory_space<vmem>>, %arg6: memref<1x128xf32, #tpu.memory_space<vmem>>, %arg7: memref<128x128xf32, #tpu.memory_space<vmem>>, %arg8: memref<1x128xf32, #tpu.memory_space<vmem>>, %arg9: memref<16x128xf32, #tpu.memory_space<vmem>>, %arg10: memref<16x128xf32, #tpu.memory_space<vmem>>) attributes {dimension_semantics = [#tpu.dimension_semantics<parallel>, #tpu.dimension_semantics<arbitrary>], iteration_bounds = array<i64: 1, 1>, scalar_prefetch = 0 : i64, scratch_operands = 1 : i64, tpu.core_type = #tpu.core_type<tc>, window_params = [{transform_indices = @transform_0, window_bounds = array<i64: 16, 128>}, {pipeline_mode = #tpu.pipeline_mode<synchronous>, transform_indices = @transform_1, window_bounds = array<i64: 128, 128>}, {pipeline_mode = #tpu.pipeline_mode<synchronous>, transform_indices = @transform_2, window_bounds = array<i64: 1, 128>}, {pipeline_mode = #tpu.pipeline_mode<synchronous>, transform_indices = @transform_3, window_bounds = array<i64: 1, 128>}, {pipeline_mode = #tpu.pipeline_mode<synchronous>, transform_indices = @transform_4, window_bounds = array<i64: 1, 128>}, {pipeline_mode = #tpu.pipeline_mode<double_buffered>, transform_indices = @transform_5, window_bounds = array<i64: 128, 128>}, {transform_indices = @transform_6, window_bounds = array<i64: 1, 128>}, {transform_indices = @transform_7, window_bounds = array<i64: 16, 128>}]} {
    %c0_i32 = arith.constant 0 : i32
    %0 = arith.cmpi eq, %arg1, %c0_i32 : i32
    %1 = arith.extui %0 : i1 to i32
    %c0_i32_0 = arith.constant 0 : i32
    %2 = arith.cmpi ne, %1, %c0_i32_0 : i32
    scf.if %2 {
      %c0_8 = arith.constant 0 : index
      %c0_9 = arith.constant 0 : index
      %10 = vector.load %arg2[%c0_8, %c0_9] : memref<16x128xf32, #tpu.memory_space<vmem>>, vector<16x128xf32>
      %c0_10 = arith.constant 0 : index
      %c0_11 = arith.constant 0 : index
      %11 = vector.load %arg3[%c0_10, %c0_11] : memref<128x128xf32, #tpu.memory_space<vmem>>, vector<128x128xf32>
      %cst_12 = arith.constant dense<0.000000e+00> : vector<16x128xf32>
      %12 = tpu.matmul %10, %11, %cst_12 {dimension_numbers = #tpu.dot_dimension_numbers<[1], [1], [0], [0], [0, 0, 1, 0], [], []>} : vector<16x128xf32>, vector<128x128xf32>, vector<16x128xf32> -> vector<16x128xf32>
      %c0_13 = arith.constant 0 : index
      %c0_14 = arith.constant 0 : index
      %13 = vector.load %arg4[%c0_13, %c0_14] : memref<1x128xf32, #tpu.memory_space<vmem>>, vector<1x128xf32>
      %14 = vector.broadcast %13 : vector<1x128xf32> to vector<16x128xf32>
      %15 = arith.addf %12, %14 : vector<16x128xf32>
      %cst_15 = arith.constant 5.000000e-01 : f32
      %16 = vector.broadcast %cst_15 : f32 to vector<16x128xf32>
      %17 = arith.mulf %16, %15 : vector<16x128xf32>
      %cst_16 = arith.constant 0.707106769 : f32
      %18 = vector.broadcast %cst_16 : f32 to vector<16x128xf32>
      %19 = arith.mulf %15, %18 : vector<16x128xf32>
      %20 = math.erf %19 : vector<16x128xf32>
      %cst_17 = arith.constant 1.000000e+00 : f32
      %21 = vector.broadcast %cst_17 : f32 to vector<16x128xf32>
      %22 = arith.addf %21, %20 : vector<16x128xf32>
      %23 = arith.mulf %17, %22 : vector<16x128xf32>
      %24 = tpu.iota {dimensions = array<i32: 1>} : vector<1x128xi32>
      %c32_i32 = arith.constant 32 : i32
      %25 = vector.broadcast %c32_i32 : i32 to vector<1x128xi32>
      %26 = arith.cmpi slt, %24, %25 : vector<1x128xi32>
      %cst_18 = arith.constant 0.000000e+00 : f32
      %27 = vector.shape_cast %26 : vector<1x128xi1> to vector<1x128xi1>
      %28 = vector.broadcast %27 : vector<1x128xi1> to vector<16x128xi1>
      %29 = vector.broadcast %cst_18 : f32 to vector<16x128xf32>
      %30 = arith.select %28, %23, %29 : vector<16x128xi1>, vector<16x128xf32>
      %cst_19 = arith.constant dense<0.000000e+00> : vector<16xf32>
      %31 = vector.multi_reduction <add>, %30, %cst_19 [1] : vector<16x128xf32> to vector<16xf32>
      %32 = vector.shape_cast %31 : vector<16xf32> to vector<16x1xf32>
      %cst_20 = arith.constant 3.125000e-02 : f32
      %33 = vector.broadcast %cst_20 : f32 to vector<16x1xf32>
      %34 = arith.mulf %32, %33 : vector<16x1xf32>
      %35 = vector.broadcast %34 : vector<16x1xf32> to vector<16x128xf32>
      %36 = arith.subf %30, %35 : vector<16x128xf32>
      %cst_21 = arith.constant 0.000000e+00 : f32
      %37 = vector.shape_cast %26 : vector<1x128xi1> to vector<1x128xi1>
      %38 = vector.broadcast %37 : vector<1x128xi1> to vector<16x128xi1>
      %39 = vector.broadcast %cst_21 : f32 to vector<16x128xf32>
      %40 = arith.select %38, %36, %39 : vector<16x128xi1>, vector<16x128xf32>
      %41 = arith.mulf %40, %40 : vector<16x128xf32>
      %cst_22 = arith.constant dense<0.000000e+00> : vector<16xf32>
      %42 = vector.multi_reduction <add>, %41, %cst_22 [1] : vector<16x128xf32> to vector<16xf32>
      %43 = vector.shape_cast %42 : vector<16xf32> to vector<16x1xf32>
      %cst_23 = arith.constant 3.125000e-02 : f32
      %44 = vector.broadcast %cst_23 : f32 to vector<16x1xf32>
      %45 = arith.mulf %43, %44 : vector<16x1xf32>
      %cst_24 = arith.constant 9.99999996E-13 : f32
      %46 = vector.broadcast %cst_24 : f32 to vector<16x1xf32>
      %47 = arith.addf %45, %46 : vector<16x1xf32>
      %48 = math.rsqrt %47 : vector<16x1xf32>
      %49 = vector.broadcast %48 : vector<16x1xf32> to vector<16x128xf32>
      %50 = arith.mulf %40, %49 : vector<16x128xf32>
      %c0_25 = arith.constant 0 : index
      %c0_26 = arith.constant 0 : index
      %51 = vector.load %arg5[%c0_25, %c0_26] : memref<1x128xf32, #tpu.memory_space<vmem>>, vector<1x128xf32>
      %52 = vector.broadcast %51 : vector<1x128xf32> to vector<16x128xf32>
      %53 = arith.mulf %50, %52 : vector<16x128xf32>
      %c0_27 = arith.constant 0 : index
      %c0_28 = arith.constant 0 : index
      %54 = vector.load %arg6[%c0_27, %c0_28] : memref<1x128xf32, #tpu.memory_space<vmem>>, vector<1x128xf32>
      %55 = vector.broadcast %54 : vector<1x128xf32> to vector<16x128xf32>
      %56 = arith.addf %53, %55 : vector<16x128xf32>
      %c0_29 = arith.constant 0 : index
      %c0_30 = arith.constant 0 : index
      %57 = vector.load %arg10[%c0_29, %c0_30] : memref<16x128xf32, #tpu.memory_space<vmem>>, vector<16x128xf32>
      tpu.vector_store %arg10[%c0_29, %c0_30], %56 {strides = array<i32>} : memref<16x128xf32, #tpu.memory_space<vmem>>, vector<16x128xf32>,
    } else {
    }
    %c0 = arith.constant 0 : index
    %c0_1 = arith.constant 0 : index
    %3 = vector.load %arg10[%c0, %c0_1] : memref<16x128xf32, #tpu.memory_space<vmem>>, vector<16x128xf32>
    %c0_2 = arith.constant 0 : index
    %c0_3 = arith.constant 0 : index
    %4 = vector.load %arg7[%c0_2, %c0_3] : memref<128x128xf32, #tpu.memory_space<vmem>>, vector<128x128xf32>
    %cst = arith.constant dense<0.000000e+00> : vector<16x128xf32>
    %5 = tpu.matmul %3, %4, %cst {dimension_numbers = #tpu.dot_dimension_numbers<[1], [1], [0], [0], [0, 0, 1, 0], [], []>} : vector<16x128xf32>, vector<128x128xf32>, vector<16x128xf32> -> vector<16x128xf32>
    %c0_4 = arith.constant 0 : index
    %c0_5 = arith.constant 0 : index
    %6 = vector.load %arg8[%c0_4, %c0_5] : memref<1x128xf32, #tpu.memory_space<vmem>>, vector<1x128xf32>
    %7 = vector.broadcast %6 : vector<1x128xf32> to vector<16x128xf32>
    %8 = arith.addf %5, %7 : vector<16x128xf32>
    %c0_6 = arith.constant 0 : index
    %c0_7 = arith.constant 0 : index
    %9 = vector.load %arg9[%c0_6, %c0_7] : memref<16x128xf32, #tpu.memory_space<vmem>>, vector<16x128xf32>
    tpu.vector_store %arg9[%c0_6, %c0_7], %8 {strides = array<i32>} : memref<16x128xf32, #tpu.memory_space<vmem>>, vector<16x128xf32>,
    return
  }
  func.func @transform_0(%arg0: i32, %arg1: i32) -> (i32, i32) {
    %c0_i32 = arith.constant 0 : i32
    %c0_i32_0 = arith.constant 0 : i32
    return %arg0, %c0_i32 : i32, i32
  }
  func.func @transform_1(%arg0: i32, %arg1: i32) -> (i32, i32) {
    %c0_i32 = arith.constant 0 : i32
    %c0_i32_0 = arith.constant 0 : i32
    %c0_i32_1 = arith.constant 0 : i32
    return %c0_i32, %c0_i32_0 : i32, i32
  }
  func.func @transform_2(%arg0: i32, %arg1: i32) -> (i32, i32) {
    %c0_i32 = arith.constant 0 : i32
    %c0_i32_0 = arith.constant 0 : i32
    %c0_i32_1 = arith.constant 0 : i32
    return %c0_i32, %c0_i32_0 : i32, i32
  }
  func.func @transform_3(%arg0: i32, %arg1: i32) -> (i32, i32) {
    %c0_i32 = arith.constant 0 : i32
    %c0_i32_0 = arith.constant 0 : i32
    %c0_i32_1 = arith.constant 0 : i32
    return %c0_i32, %c0_i32_0 : i32, i32
  }
  func.func @transform_4(%arg0: i32, %arg1: i32) -> (i32, i32) {
    %c0_i32 = arith.constant 0 : i32
    %c0_i32_0 = arith.constant 0 : i32
    %c0_i32_1 = arith.constant 0 : i32
    return %c0_i32, %c0_i32_0 : i32, i32
  }
  func.func @transform_5(%arg0: i32, %arg1: i32) -> (i32, i32) {
    %c0_i32 = arith.constant 0 : i32
    %c0_i32_0 = arith.constant 0 : i32
    return %arg1, %c0_i32 : i32, i32
  }
  func.func @transform_6(%arg0: i32, %arg1: i32) -> (i32, i32) {
    %c0_i32 = arith.constant 0 : i32
    %c0_i32_0 = arith.constant 0 : i32
    return %c0_i32, %arg1 : i32, i32
  }
  func.func @transform_7(%arg0: i32, %arg1: i32) -> (i32, i32) {
    %c0_i32 = arith.constant 0 : i32
    return %arg0, %arg1 : i32, i32
  }
}

</mosaic_0001>

<llo_original>
// kernel: tpu_custom_call.1
$region0: #{tpu_custom_call.1}
  #allocation0 [shape = 'u32[]', space=smem, size = 0x4, offset = 0x4, fixed_abs, tag = 'smem constant byte address 0x4 - core index']
  #allocation1 [shape = 'u32[144,128]{1,0:T(1,128)}', space=vmem, size = 0x12000, scoped, tag = 'internal scratch']
  #allocation2 [shape = 'f32[16,128]{1,0:T(8,128)}', space=vmem, size = 0x2000, scoped, tag = 'scratch operand']
  %s0 = inlined_call_operand.hbm [shape: f32[16,128], index: 0, kind: input, shape index: {}]
  %s1 = inlined_call_operand.hbm [shape: f32[128,128], index: 1, kind: input, shape index: {}]
  %s2 = inlined_call_operand.vmem [shape: f32[1,128], index: 2, kind: input, shape index: {}]
  %s3 = inlined_call_operand.vmem [shape: f32[1,128], index: 3, kind: input, shape index: {}]
  %s4 = inlined_call_operand.vmem [shape: f32[1,128], index: 4, kind: input, shape index: {}]
  %s5 = inlined_call_operand.hbm [shape: f32[128,128], index: 5, kind: input, shape index: {}]
  %s6 = inlined_call_operand.vmem [shape: f32[1,128], index: 6, kind: input, shape index: {}]
  %s7 = inlined_call_operand.hbm [shape: f32[16,128], index: 7, kind: output, shape index: {}]
  %s8 = sld [smem:[#allocation0]]
  $region54: #{tpu_custom_call.1} parent=0
    _
  %s10 = ssub.s32 1, %s8
  %s11 = scalar_select 0, %s10, %s8
  $region1: #{tpu_custom_call.1} parent=0
    #allocation3 [shape = 'u8[8192]{0}', space=vmem, size = 0x2000, scoped, tag = 'input window, operand 0, single buffered']
    #allocation4 [shape = 's32[1]{0}', space=sflag, size = 0x4, scoped, tag = 'scoped memory for tpu_custom_call.1']
    #allocation5 [shape = 's32[1]{0}', space=sflag, size = 0x4, scoped, tag = 'scoped memory for tpu_custom_call.1']
    #allocation6 [shape = 'u8[65536]{0}', space=vmem, size = 0x10000, scoped, tag = 'input window, operand 1, single buffered']
    #allocation7 [shape = 's32[1]{0}', space=sflag, size = 0x4, scoped, tag = 'scoped memory for tpu_custom_call.1']
    #allocation8 [shape = 'u8[65536]{0}', space=vmem, size = 0x10000, scoped, tag = 'input window, operand 5, single buffered']
    #allocation9 [shape = 'u8[8192]{0}', space=vmem, size = 0x2000, scoped, tag = 'output window, operand 0, single buffered']
    %12 = vsyncpa [#allocation4], 0
    %13 = vsyncpa [#allocation7], 0
    %14 = vsyncpa [#allocation5], 0
    // Predicated region
    $region2: #{tpu_custom_call.1} parent=1 // pred_check
      _
    $region3: #{tpu_custom_call.1} parent=1 // pred_check_branch
      %16 = sbr.rel (0) target = $region5
    $region4: #{tpu_custom_call.1} parent=1 // pred_region
      %s18 = ssub.s32 256, 256
      %19 = vsyncadd [#allocation4], %s18
      %s20 = sshll.u32 [#allocation3], 4
      %s21 = int_to_ptr.vmem [resolvable:$true] %s20
      %26 = dma.hbm_to_vmem [thread:$0]  %s0, 256, %s21, [#allocation4], 128, 128, 8
    $region5: #{tpu_custom_call.1} parent=1 // pred_fallthru
      _
    // Predicated region
    $region6: #{tpu_custom_call.1} parent=1 // pred_check
      _
    $region7: #{tpu_custom_call.1} parent=1 // pred_check_branch
      %28 = sbr.rel (0) target = $region9
    $region8: #{tpu_custom_call.1} parent=1 // pred_region
      %s30 = ssub.s32 2048, 2048
      %31 = vsyncadd [#allocation7], %s30
      %s32 = sshll.u32 [#allocation6], 4
      %s33 = int_to_ptr.vmem [resolvable:$true] %s32
      %38 = dma.hbm_to_vmem [thread:$0]  %s1, 2048, %s33, [#allocation7], 128, 128, 8
    $region9: #{tpu_custom_call.1} parent=1 // pred_fallthru
      _
    // Predicated region
    $region10: #{tpu_custom_call.1} parent=1 // pred_check
      _
    $region11: #{tpu_custom_call.1} parent=1 // pred_check_branch
      %40 = sbr.rel (0) target = $region13
    $region12: #{tpu_custom_call.1} parent=1 // pred_region
      _
    $region13: #{tpu_custom_call.1} parent=1 // pred_fallthru
      _
    // Predicated region
    $region14: #{tpu_custom_call.1} parent=1 // pred_check
      _
    $region15: #{tpu_custom_call.1} parent=1 // pred_check_branch
      %42 = sbr.rel (0) target = $region17
    $region16: #{tpu_custom_call.1} parent=1 // pred_region
      _
    $region17: #{tpu_custom_call.1} parent=1 // pred_fallthru
      _
    // Predicated region
    $region18: #{tpu_custom_call.1} parent=1 // pred_check
      _
    $region19: #{tpu_custom_call.1} parent=1 // pred_check_branch
      %44 = sbr.rel (0) target = $region21
    $region20: #{tpu_custom_call.1} parent=1 // pred_region
      _
    $region21: #{tpu_custom_call.1} parent=1 // pred_fallthru
      _
    // Predicated region
    $region22: #{tpu_custom_call.1} parent=1 // pred_check
      _
    $region23: #{tpu_custom_call.1} parent=1 // pred_check_branch
      %46 = sbr.rel (0) target = $region25
    $region24: #{tpu_custom_call.1} parent=1 // pred_region
      %s48 = ssub.s32 2048, 2048
      %49 = vsyncadd [#allocation7], %s48
      %s50 = sshll.u32 [#allocation8], 4
      %s51 = int_to_ptr.vmem [resolvable:$true] %s50
      %56 = dma.hbm_to_vmem [thread:$0]  %s5, 2048, %s51, [#allocation7], 128, 128, 8
    $region25: #{tpu_custom_call.1} parent=1 // pred_fallthru
      _
    // Predicated region
    $region26: #{tpu_custom_call.1} parent=1 // pred_check
      _
    $region27: #{tpu_custom_call.1} parent=1 // pred_check_branch
      %58 = sbr.rel (0) target = $region29
    $region28: #{tpu_custom_call.1} parent=1 // pred_region
      _
    $region29: #{tpu_custom_call.1} parent=1 // pred_fallthru
      _
    // Predicated region
    $region30: #{tpu_custom_call.1} parent=1 // pred_check
      _
    $region31: #{tpu_custom_call.1} parent=1 // pred_check_branch
      %60 = sbr.rel (0) target = $region33
    $region32: #{tpu_custom_call.1} parent=1 // pred_region
      %61 = dma.done [#allocation4], 256
    $region33: #{tpu_custom_call.1} parent=1 // pred_fallthru
      _
    // Predicated region
    $region34: #{tpu_custom_call.1} parent=1 // pred_check
      _
    $region35: #{tpu_custom_call.1} parent=1 // pred_check_branch
      %63 = sbr.rel (0) target = $region37
    $region36: #{tpu_custom_call.1} parent=1 // pred_region
      %64 = dma.done [#allocation7], 2048
    $region37: #{tpu_custom_call.1} parent=1 // pred_fallthru
      _
    // Predicated region
    $region38: #{tpu_custom_call.1} parent=1 // pred_check
      _
    $region39: #{tpu_custom_call.1} parent=1 // pred_check_branch
      %66 = sbr.rel (0) target = $region41
    $region40: #{tpu_custom_call.1} parent=1 // pred_region
      %67 = dma.done [#allocation7], 2048
    $region41: #{tpu_custom_call.1} parent=1 // pred_fallthru
      _
    %p68 = scmp.eq.s32.totalorder 0, 0
    // Predicated region
    $region42: #{tpu_custom_call.1} parent=1 // pred_check
      %p69 = pneg %p68
    $region43: #{tpu_custom_call.1} parent=1 // pred_check_branch
      %71 = sbr.rel (%p69) target = $region45
    $region44: #{tpu_custom_call.1} parent=1 // pred_region
      %v72 = vld [vmem:[#allocation3] sm:$0xff]
      %v73 = vld [vmem:[#allocation3 + $0x8] sm:$0xff]
      %v74 = vld [vmem:[#allocation6] sm:$0xff]
      %v75 = vld [vmem:[#allocation6 + $0x8] sm:$0xff]
      %v76 = vld [vmem:[#allocation6 + $0x10] sm:$0xff]
      %v77 = vld [vmem:[#allocation6 + $0x18] sm:$0xff]
      %v78 = vld [vmem:[#allocation6 + $0x20] sm:$0xff]
      %v79 = vld [vmem:[#allocation6 + $0x28] sm:$0xff]
      %v80 = vld [vmem:[#allocation6 + $0x30] sm:$0xff]
      %v81 = vld [vmem:[#allocation6 + $0x38] sm:$0xff]
      %v82 = vld [vmem:[#allocation6 + $0x40] sm:$0xff]
      %v83 = vld [vmem:[#allocation6 + $0x48] sm:$0xff]
      %v84 = vld [vmem:[#allocation6 + $0x50] sm:$0xff]
      %v85 = vld [vmem:[#allocation6 + $0x58] sm:$0xff]
      %v86 = vld [vmem:[#allocation6 + $0x60] sm:$0xff]
      %v87 = vld [vmem:[#allocation6 + $0x68] sm:$0xff]
      %v88 = vld [vmem:[#allocation6 + $0x70] sm:$0xff]
      %v89 = vld [vmem:[#allocation6 + $0x78] sm:$0xff]
      %v90 = vld [vmem:[%s2] sm:$0x1]
      %v92 = vlaneseq
      %v93 = vshrl.u32 %v92, 7
      %v94 = vsub.s32 0, %v93
      %v95 = vrot.slane %v90, %v94
      %97 = vmatprep.subr.mxu0 0.0
      %98 = vmatpush1.xpose.msra.mxu0 %v89
      %99 = vmatprep.subr.mxu0 0.0
      %100 = vmatpush1.xpose.msra.mxu0 %v88
      %101 = vmatprep.subr.mxu0 0.0
      %102 = vmatpush1.xpose.msra.mxu0 %v87
      %103 = vmatprep.subr.mxu0 0.0
      %104 = vmatpush1.xpose.msra.mxu0 %v86
      %105 = vmatprep.subr.mxu0 0.0
      %106 = vmatpush1.xpose.msra.mxu0 %v85
      %107 = vmatprep.subr.mxu0 0.0
      %108 = vmatpush1.xpose.msra.mxu0 %v84
      %109 = vmatprep.subr.mxu0 0.0
      %110 = vmatpush1.xpose.msra.mxu0 %v83
      %111 = vmatprep.subr.mxu0 0.0
      %112 = vmatpush1.xpose.msra.mxu0 %v82
      %113 = vmatprep.subr.mxu0 0.0
      %114 = vmatpush1.xpose.msra.mxu0 %v81
      %115 = vmatprep.subr.mxu0 0.0
      %116 = vmatpush1.xpose.msra.mxu0 %v80
      %117 = vmatprep.subr.mxu0 0.0
      %118 = vmatpush1.xpose.msra.mxu0 %v79
      %119 = vmatprep.subr.mxu0 0.0
      %120 = vmatpush1.xpose.msra.mxu0 %v78
      %121 = vmatprep.subr.mxu0 0.0
      %122 = vmatpush1.xpose.msra.mxu0 %v77
      %123 = vmatprep.subr.mxu0 0.0
      %124 = vmatpush1.xpose.msra.mxu0 %v76
      %125 = vmatprep.subr.mxu0 0.0
      %126 = vmatpush1.xpose.msra.mxu0 %v75
      %127 = vmatprep.subr.mxu0 0.0
      %128 = vmatpush1.xpose.msra.mxu0 %v74
      %129 = vmatprep.subr.mxu0 0.0
      %130 = vmatpush2.xpose.msra.mxu0 0.0
      %131 = vmatprep.subr.mxu0 0.0
      %132 = vmatpush2.xpose.msra.mxu0 0.0
      %133 = vmatprep.subr.mxu0 0.0
      %134 = vmatpush2.xpose.msra.mxu0 0.0
      %135 = vmatprep.subr.mxu0 0.0
      %136 = vmatpush2.xpose.msra.mxu0 0.0
      %137 = vmatprep.subr.mxu0 0.0
      %138 = vmatpush2.xpose.msra.mxu0 0.0
      %139 = vmatprep.subr.mxu0 0.0
      %140 = vmatpush2.xpose.msra.mxu0 0.0
      %141 = vmatprep.subr.mxu0 0.0
      %142 = vmatpush2.xpose.msra.mxu0 0.0
      %143 = vmatprep.subr.mxu0 0.0
      %144 = vmatpush2.xpose.msra.mxu0 0.0
      %145 = vmatprep.subr.mxu0 0.0
      %146 = vmatpush2.xpose.msra.mxu0 0.0
      %147 = vmatprep.subr.mxu0 0.0
      %148 = vmatpush2.xpose.msra.mxu0 0.0
      %149 = vmatprep.subr.mxu0 0.0
      %150 = vmatpush2.xpose.msra.mxu0 0.0
      %151 = vmatprep.subr.mxu0 0.0
      %152 = vmatpush2.xpose.msra.mxu0 0.0
      %153 = vmatprep.subr.mxu0 0.0
      %154 = vmatpush2.xpose.msra.mxu0 0.0
      %155 = vmatprep.subr.mxu0 0.0
      %156 = vmatpush2.xpose.msra.mxu0 0.0
      %157 = vmatprep.subr.mxu0 0.0
      %158 = vmatpush2.xpose.msra.mxu0 0.0
      %159 = vmatprep.subr.mxu0 0.0
      %160 = vmatpush2.xpose.msra.mxu0 0.0
      %161 = vmatprep.mubr.f32.mxu0 0.0
      %162 = vmatmul.mubr.f32.gmra.mxu0 %v72
      %v163 = vpop.f32.mrf.mxu0
      %v164 = vadd.f32 %v95, %v163
      %v165 = vpop.f32.mrf.mxu0
      %166 = vmatprep.mubr.f32.mxu0 0.0
      %167 = vmatmul.mubr.f32.gmra.mxu0 %v73
      %v168 = vpop.f32.mrf.mxu0
      %v169 = vadd.f32 %v95, %v168
      %v170 = vpop.f32.mrf.mxu0
      %171 = vdwg.mxu0
      %v172 = vmul.f32 %v164, 0.5
      %v173 = vmul.f32 %v169, 0.5
      %v174 = vmul.f32 %v164, 0.70710677
      %v175 = vmul.f32 %v169, 0.70710677
      %v176 = verf.f32.pop %v174
      %v177 = verf.f32.pop %v175
      %v178 = vadd.f32 %v176, 1.0
      %v179 = vadd.f32 %v177, 1.0
      %v180 = vmul.f32 %v172, %v178
      %v181 = vmul.f32 %v173, %v179
      %v182 = vlaneseq
      %v183 = vand.u32 %v182, 127
      %vm184 = vcmp.lt.s32.totalorder %v183, 32
      %v185 = vsel %vm184, 1, 0
      %vm186 = vcmp.eq.s32.totalorder %v185, 1
      %v187 = vsel %vm186, %v180, 0.0
      %v188 = vsel %vm186, %v181, 0.0
      %189 = vadd.xlane.f32.xlu0 %v187
      %v190 = vpop.xlane.xlu0 %189
      %191 = vadd.xlane.f32.xlu0 %v188
      %v192 = vpop.xlane.xlu0 %191
      %v193 = vmul.f32 %v190, 0.03125
      %v194 = vmul.f32 %v192, 0.03125
      %v195 = vsub.f32 %v187, %v193
      %v196 = vsub.f32 %v188, %v194
      %v197 = vsel %vm186, %v195, 0.0
      %v198 = vsel %vm186, %v196, 0.0
      %v199 = vmul.f32 %v197, %v197
      %v200 = vmul.f32 %v198, %v198
      %201 = vadd.xlane.f32.xlu0 %v199
      %v202 = vpop.xlane.xlu0 %201
      %203 = vadd.xlane.f32.xlu0 %v200
      %v204 = vpop.xlane.xlu0 %203
      %v205 = vmul.f32 %v202, 0.03125
      %v206 = vmul.f32 %v204, 0.03125
      %v207 = vadd.f32 %v205, 1e-12
      %v208 = vadd.f32 %v206, 1e-12
      %v209 = vrsqrt.pop %v207
      %v210 = vrsqrt.pop %v208
      %v211 = vmul.f32 %v197, %v209
      %v212 = vmul.f32 %v198, %v210
      %v213 = vld [vmem:[%s3] sm:$0x1]
      %v215 = vlaneseq
      %v216 = vshrl.u32 %v215, 7
      %v217 = vsub.s32 0, %v216
      %v218 = vrot.slane %v213, %v217
      %v220 = vmul.f32 %v211, %v218
      %v221 = vmul.f32 %v212, %v218
      %v222 = vld [vmem:[%s4] sm:$0x1]
      %v224 = vlaneseq
      %v225 = vshrl.u32 %v224, 7
      %v226 = vsub.s32 0, %v225
      %v227 = vrot.slane %v222, %v226
      %v229 = vadd.f32 %v220, %v227
      %v230 = vadd.f32 %v221, %v227
      %231 = vst [vmem:[#allocation2] sm:$0xff] %v229
      %232 = vst [vmem:[#allocation2 + $0x8] sm:$0xff] %v230
    $region45: #{tpu_custom_call.1} parent=1 // pred_fallthru
      _
    %v233 = vld [vmem:[#allocation2] sm:$0xff]
    %v234 = vld [vmem:[#allocation2 + $0x8] sm:$0xff]
    %v235 = vld [vmem:[#allocation8] sm:$0xff]
    %v236 = vld [vmem:[#allocation8 + $0x8] sm:$0xff]
    %v237 = vld [vmem:[#allocation8 + $0x10] sm:$0xff]
    %v238 = vld [vmem:[#allocation8 + $0x18] sm:$0xff]
    %v239 = vld [vmem:[#allocation8 + $0x20] sm:$0xff]
    %v240 = vld [vmem:[#allocation8 + $0x28] sm:$0xff]
    %v241 = vld [vmem:[#allocation8 + $0x30] sm:$0xff]
    %v242 = vld [vmem:[#allocation8 + $0x38] sm:$0xff]
    %v243 = vld [vmem:[#allocation8 + $0x40] sm:$0xff]
    %v244 = vld [vmem:[#allocation8 + $0x48] sm:$0xff]
    %v245 = vld [vmem:[#allocation8 + $0x50] sm:$0xff]
    %v246 = vld [vmem:[#allocation8 + $0x58] sm:$0xff]
    %v247 = vld [vmem:[#allocation8 + $0x60] sm:$0xff]
    %v248 = vld [vmem:[#allocation8 + $0x68] sm:$0xff]
    %v249 = vld [vmem:[#allocation8 + $0x70] sm:$0xff]
    %v250 = vld [vmem:[#allocation8 + $0x78] sm:$0xff]
    %v251 = vld [vmem:[%s6] sm:$0x1]
    %v253 = vlaneseq
    %v254 = vshrl.u32 %v253, 7
    %v255 = vsub.s32 0, %v254
    %v256 = vrot.slane %v251, %v255
    %258 = vmatprep.subr.mxu0 0.0
    %259 = vmatpush1.xpose.msra.mxu0 %v250
    %260 = vmatprep.subr.mxu0 0.0
    %261 = vmatpush1.xpose.msra.mxu0 %v249
    %262 = vmatprep.subr.mxu0 0.0
    %263 = vmatpush1.xpose.msra.mxu0 %v248
    %264 = vmatprep.subr.mxu0 0.0
    %265 = vmatpush1.xpose.msra.mxu0 %v247
    %266 = vmatprep.subr.mxu0 0.0
    %267 = vmatpush1.xpose.msra.mxu0 %v246
    %268 = vmatprep.subr.mxu0 0.0
    %269 = vmatpush1.xpose.msra.mxu0 %v245
    %270 = vmatprep.subr.mxu0 0.0
    %271 = vmatpush1.xpose.msra.mxu0 %v244
    %272 = vmatprep.subr.mxu0 0.0
    %273 = vmatpush1.xpose.msra.mxu0 %v243
    %274 = vmatprep.subr.mxu0 0.0
    %275 = vmatpush1.xpose.msra.mxu0 %v242
    %276 = vmatprep.subr.mxu0 0.0
    %277 = vmatpush1.xpose.msra.mxu0 %v241
    %278 = vmatprep.subr.mxu0 0.0
    %279 = vmatpush1.xpose.msra.mxu0 %v240
    %280 = vmatprep.subr.mxu0 0.0
    %281 = vmatpush1.xpose.msra.mxu0 %v239
    %282 = vmatprep.subr.mxu0 0.0
    %283 = vmatpush1.xpose.msra.mxu0 %v238
    %284 = vmatprep.subr.mxu0 0.0
    %285 = vmatpush1.xpose.msra.mxu0 %v237
    %286 = vmatprep.subr.mxu0 0.0
    %287 = vmatpush1.xpose.msra.mxu0 %v236
    %288 = vmatprep.subr.mxu0 0.0
    %289 = vmatpush1.xpose.msra.mxu0 %v235
    %290 = vmatprep.subr.mxu0 0.0
    %291 = vmatpush2.xpose.msra.mxu0 0.0
    %292 = vmatprep.subr.mxu0 0.0
    %293 = vmatpush2.xpose.msra.mxu0 0.0
    %294 = vmatprep.subr.mxu0 0.0
    %295 = vmatpush2.xpose.msra.mxu0 0.0
    %296 = vmatprep.subr.mxu0 0.0
    %297 = vmatpush2.xpose.msra.mxu0 0.0
    %298 = vmatprep.subr.mxu0 0.0
    %299 = vmatpush2.xpose.msra.mxu0 0.0
    %300 = vmatprep.subr.mxu0 0.0
    %301 = vmatpush2.xpose.msra.mxu0 0.0
    %302 = vmatprep.subr.mxu0 0.0
    %303 = vmatpush2.xpose.msra.mxu0 0.0
    %304 = vmatprep.subr.mxu0 0.0
    %305 = vmatpush2.xpose.msra.mxu0 0.0
    %306 = vmatprep.subr.mxu0 0.0
    %307 = vmatpush2.xpose.msra.mxu0 0.0
    %308 = vmatprep.subr.mxu0 0.0
    %309 = vmatpush2.xpose.msra.mxu0 0.0
    %310 = vmatprep.subr.mxu0 0.0
    %311 = vmatpush2.xpose.msra.mxu0 0.0
    %312 = vmatprep.subr.mxu0 0.0
    %313 = vmatpush2.xpose.msra.mxu0 0.0
    %314 = vmatprep.subr.mxu0 0.0
    %315 = vmatpush2.xpose.msra.mxu0 0.0
    %316 = vmatprep.subr.mxu0 0.0
    %317 = vmatpush2.xpose.msra.mxu0 0.0
    %318 = vmatprep.subr.mxu0 0.0
    %319 = vmatpush2.xpose.msra.mxu0 0.0
    %320 = vmatprep.subr.mxu0 0.0
    %321 = vmatpush2.xpose.msra.mxu0 0.0
    %322 = vmatprep.mubr.f32.mxu0 0.0
    %323 = vmatmul.mubr.f32.gmra.mxu0 %v233
    %v324 = vpop.f32.mrf.mxu0
    %v325 = vadd.f32 %v256, %v324
    %v326 = vpop.f32.mrf.mxu0
    %327 = vmatprep.mubr.f32.mxu0 0.0
    %328 = vmatmul.mubr.f32.gmra.mxu0 %v234
    %v329 = vpop.f32.mrf.mxu0
    %v330 = vadd.f32 %v256, %v329
    %v331 = vpop.f32.mrf.mxu0
    %332 = vdwg.mxu0
    %333 = vst [vmem:[#allocation9] sm:$0xff] %v325
    %334 = vst [vmem:[#allocation9 + $0x8] sm:$0xff] %v330
    // Predicated region
    $region46: #{tpu_custom_call.1} parent=1 // pred_check
      _
    $region47: #{tpu_custom_call.1} parent=1 // pred_check_branch
      %336 = sbr.rel (0) target = $region49
    $region48: #{tpu_custom_call.1} parent=1 // pred_region
      %s338 = ssub.s32 256, 256
      %339 = vsyncadd [#allocation5], %s338
      %s340 = sshll.u32 [#allocation9], 4
      %s341 = int_to_ptr.vmem [resolvable:$true] %s340
      %346 = dma.vmem_to_hbm [thread:$0]  %s341, 256, %s7, [#allocation5], 128, 128, 8
    $region49: #{tpu_custom_call.1} parent=1 // pred_fallthru
      _
    // Predicated region
    $region50: #{tpu_custom_call.1} parent=1 // pred_check
      _
    $region51: #{tpu_custom_call.1} parent=1 // pred_check_branch
      %348 = sbr.rel (0) target = $region53
    $region52: #{tpu_custom_call.1} parent=1 // pred_region
      %349 = dma.done [#allocation5], 256
    $region53: #{tpu_custom_call.1} parent=1 // pred_fallthru
      _
    %350 = vsyncpa [#allocation4], 1
    %351 = vsyncpa [#allocation7], 1
    %352 = vsyncpa [#allocation5], 1

</llo_original>
